<compile_context>
chip_gen: v7x
topology: tpu7x:2x2x1
jax: 0.10.0
libtpu: 0.0.40
codegen_flags: <defaults>
</compile_context>

<pallas_src>
import functools
import math

import jax
import jax.numpy as jnp
from jax.experimental import pallas as pl
from jax.experimental.pallas import tpu as pltpu


def _jsd_kernel(l1_ref, l2_ref, out_ref, *, inv_factor):
    """Per-row JS divergence for one [tile_b, C] tile of logits."""
    l1 = l1_ref[...].astype(jnp.float32)
    l2 = l2_ref[...].astype(jnp.float32)

    # Numerically stable softmax pieces along the class (last / lane) axis.
    m1 = jnp.max(l1, axis=-1, keepdims=True)
    sh1 = l1 - m1
    e1 = jnp.exp(sh1)
    z1 = jnp.sum(e1, axis=-1, keepdims=True)          # [tb, 1]
    p1 = e1 * pl.reciprocal(z1, approx=False)

    m2 = jnp.max(l2, axis=-1, keepdims=True)
    sh2 = l2 - m2
    e2 = jnp.exp(sh2)
    z2 = jnp.sum(e2, axis=-1, keepdims=True)          # [tb, 1]
    p2 = e2 * pl.reciprocal(z2, approx=False)

    psum = p1 + p2                                     # 2 * pm
    log_pm = jnp.log(psum * 0.5)

    # kl1 + kl2 = p1*logp1 + p2*logp2 - (p1+p2)*log_pm, with
    #   sum_c p1*logp1 = sum_c p1*shifted1 - log(z1)   (since sum_c p1 == 1)
    # so log-probs are never materialized as full [tb, C] tiles.
    row = (jnp.sum(p1 * sh1 + p2 * sh2 - psum * log_pm, axis=-1, keepdims=True)
           - jnp.log(z1) - jnp.log(z2))                # [tb, 1]

    # Scalar scale applied after the class reduction (on [tb, 1], not [tb, C]).
    out_ref[...] = row * (0.5 * inv_factor)


def _select_tile_b(B, C):
    """Pick a row tile: multiple of 8, ~<=1 MiB of f32 logits, >=8 grid steps."""
    # Cap by bytes so pipeline buffers + live temps stay far under VMEM limits
    # (v7x: 64 MiB physical / 32 MiB default-scoped).
    target = max(8, (1 << 20) // (4 * C))
    # Aim for at least ~8 grid steps when the batch is large enough.
    target = min(target, max(8, B // 8))
    target = max(8, (target // 8) * 8)
    if target <= B and B % target == 0:
        return target
    # Fall back to the largest divisor of B that is a multiple of 8 and <= target.
    best = None
    d = 8
    while d <= min(B, target):
        if B % d == 0:
            best = d
        d += 8
    if best is not None:
        return best
    # Odd batch sizes: a single full-extent block is always legal.
    return B


def jensen_shannon_divergence(logits1, logits2, *, base=2.0,
                              reduction="batch_reserve", tile_b=None,
                              vmem_limit_bytes=64 * 1024 * 1024):
    """JS divergence between softmax(logits1) and softmax(logits2), per row.

    logits1, logits2: [B, C] arrays.  Returns [B] (reduction='batch_reserve').
    """
    assert logits1.shape == logits2.shape and logits1.ndim == 2
    B, C = logits1.shape
    factor = math.log(base)

    if tile_b is None:
        tile_b = _select_tile_b(B, C)
    assert B % tile_b == 0, "tile_b must divide the batch size"
    if tile_b != B:
        # (8, 128) constraint: partial blocks must be sublane-aligned.
        assert tile_b % 8 == 0, "tile_b must be a multiple of 8 unless it spans the full batch"
    grid = (B // tile_b,)

    # TODO(synk): for vocab-scale C (C >> 8K), add a second 'arbitrary' grid
    # axis over C with an online (running max/sum) softmax so full-C blocks are
    # not required to fit in VMEM.

    kernel = functools.partial(_jsd_kernel, inv_factor=1.0 / factor)

    out2d = pl.pallas_call(
        kernel,
        out_shape=jax.ShapeDtypeStruct((B, 1), jnp.float32),
        grid_spec=pltpu.PrefetchScalarGridSpec(
            num_scalar_prefetch=0,
            grid=grid,
            in_specs=[
                pl.BlockSpec((tile_b, C), lambda i: (i, 0)),
                pl.BlockSpec((tile_b, C), lambda i: (i, 0)),
            ],
            out_specs=pl.BlockSpec((tile_b, 1), lambda i: (i, 0)),
        ),
        compiler_params=pltpu.CompilerParams(
            dimension_semantics=("parallel",),
            vmem_limit_bytes=vmem_limit_bytes),
    )(logits1, logits2)

    loss = out2d[:, 0]  # [B]
    if reduction == "batch_reserve":
        return loss
    # The reference module only defines 'batch_reserve' behavior in forward.
    return loss


def _reference_jsd(logits1, logits2, base=2.0):
    """Pure-JAX reference matching the PyTorch module."""
    factor = math.log(base)
    p1 = jax.nn.softmax(logits1, axis=1)
    p2 = jax.nn.softmax(logits2, axis=1)
    pm = (p1 + p2) / 2
    loss = (p1 * (jnp.log(p1) - jnp.log(pm)) +
            p2 * (jnp.log(p2) - jnp.log(pm))) / 2 / factor
    return jnp.sum(loss, axis=1)


if __name__ == "__main__":
    key = jax.random.PRNGKey(0)
    k1, k2, k3, k4 = jax.random.split(key, 4)

    # Small shape matching the module's [batch_size, class_number] logits.
    B, C = 8, 128
    logits1 = jax.random.normal(k1, (B, C), dtype=jnp.float32)
    logits2 = jax.random.normal(k2, (B, C), dtype=jnp.float32)
    out = jax.block_until_ready(jensen_shannon_divergence(logits1, logits2))
    ref = _reference_jsd(logits1, logits2)
    assert out.shape == (B,)
    assert jnp.allclose(out, ref, atol=1e-5, rtol=1e-5), (out, ref)

    # Larger batch to exercise the multi-step pipelined grid (tile_b < B).
    B2, C2 = 64, 128
    la = jax.random.normal(k3, (B2, C2), dtype=jnp.float32)
    lb = jax.random.normal(k4, (B2, C2), dtype=jnp.float32)
    out2 = jax.block_until_ready(jensen_shannon_divergence(la, lb))
    ref2 = _reference_jsd(la, lb)
    assert out2.shape == (B2,)
    assert jnp.allclose(out2, ref2, atol=1e-5, rtol=1e-5), (out2, ref2)

    print("KERNEL_OK")
</pallas_src>

<mosaic_0001>
module attributes {stable_mosaic.version = 11 : i64} {
  func.func @_jsd_kernel(%arg0: i32, %arg1: memref<8x128xf32, #tpu.memory_space<vmem>>, %arg2: memref<8x128xf32, #tpu.memory_space<vmem>>, %arg3: memref<8x1xf32, #tpu.memory_space<vmem>>) attributes {dimension_semantics = [#tpu.dimension_semantics<parallel>], iteration_bounds = array<i64: 1>, scalar_prefetch = 0 : i64, scratch_operands = 0 : i64, tpu.core_type = #tpu.core_type<tc>, window_params = [{transform_indices = @transform_0, window_bounds = array<i64: 8, 128>}, {transform_indices = @transform_1, window_bounds = array<i64: 8, 128>}, {transform_indices = @transform_2, window_bounds = array<i64: 8, 1>}]} {
    %c0 = arith.constant 0 : index
    %c0_0 = arith.constant 0 : index
    %0 = vector.load %arg1[%c0, %c0_0] : memref<8x128xf32, #tpu.memory_space<vmem>>, vector<8x128xf32>
    %c0_1 = arith.constant 0 : index
    %c0_2 = arith.constant 0 : index
    %1 = vector.load %arg2[%c0_1, %c0_2] : memref<8x128xf32, #tpu.memory_space<vmem>>, vector<8x128xf32>
    %cst = arith.constant dense<0xFF800000> : vector<8xf32>
    %2 = vector.multi_reduction <maximumf>, %0, %cst [1] : vector<8x128xf32> to vector<8xf32>
    %3 = vector.shape_cast %2 : vector<8xf32> to vector<8x1xf32>
    %4 = vector.broadcast %3 : vector<8x1xf32> to vector<8x128xf32>
    %5 = arith.subf %0, %4 : vector<8x128xf32>
    %6 = math.exp %5 : vector<8x128xf32>
    %cst_3 = arith.constant dense<0.000000e+00> : vector<8xf32>
    %7 = vector.multi_reduction <add>, %6, %cst_3 [1] : vector<8x128xf32> to vector<8xf32>
    %8 = vector.shape_cast %7 : vector<8xf32> to vector<8x1xf32>
    %9 = tpu.reciprocal %8 : vector<8x1xf32> -> vector<8x1xf32>
    %10 = vector.broadcast %9 : vector<8x1xf32> to vector<8x128xf32>
    %11 = arith.mulf %6, %10 : vector<8x128xf32>
    %cst_4 = arith.constant dense<0xFF800000> : vector<8xf32>
    %12 = vector.multi_reduction <maximumf>, %1, %cst_4 [1] : vector<8x128xf32> to vector<8xf32>
    %13 = vector.shape_cast %12 : vector<8xf32> to vector<8x1xf32>
    %14 = vector.broadcast %13 : vector<8x1xf32> to vector<8x128xf32>
    %15 = arith.subf %1, %14 : vector<8x128xf32>
    %16 = math.exp %15 : vector<8x128xf32>
    %cst_5 = arith.constant dense<0.000000e+00> : vector<8xf32>
    %17 = vector.multi_reduction <add>, %16, %cst_5 [1] : vector<8x128xf32> to vector<8xf32>
    %18 = vector.shape_cast %17 : vector<8xf32> to vector<8x1xf32>
    %19 = tpu.reciprocal %18 : vector<8x1xf32> -> vector<8x1xf32>
    %20 = vector.broadcast %19 : vector<8x1xf32> to vector<8x128xf32>
    %21 = arith.mulf %16, %20 : vector<8x128xf32>
    %22 = arith.addf %11, %21 : vector<8x128xf32>
    %cst_6 = arith.constant 5.000000e-01 : f32
    %23 = vector.broadcast %cst_6 : f32 to vector<8x128xf32>
    %24 = arith.mulf %22, %23 : vector<8x128xf32>
    %25 = math.log %24 : vector<8x128xf32>
    %26 = arith.mulf %11, %5 : vector<8x128xf32>
    %27 = arith.mulf %21, %15 : vector<8x128xf32>
    %28 = arith.addf %26, %27 : vector<8x128xf32>
    %29 = arith.mulf %22, %25 : vector<8x128xf32>
    %30 = arith.subf %28, %29 : vector<8x128xf32>
    %cst_7 = arith.constant dense<0.000000e+00> : vector<8xf32>
    %31 = vector.multi_reduction <add>, %30, %cst_7 [1] : vector<8x128xf32> to vector<8xf32>
    %32 = vector.shape_cast %31 : vector<8xf32> to vector<8x1xf32>
    %33 = math.log %8 : vector<8x1xf32>
    %34 = arith.subf %32, %33 : vector<8x1xf32>
    %35 = math.log %18 : vector<8x1xf32>
    %36 = arith.subf %34, %35 : vector<8x1xf32>
    %cst_8 = arith.constant 0.72134751 : f32
    %37 = vector.broadcast %cst_8 : f32 to vector<8x1xf32>
    %38 = arith.mulf %36, %37 : vector<8x1xf32>
    %c0_9 = arith.constant 0 : index
    %c0_10 = arith.constant 0 : index
    %39 = vector.load %arg3[%c0_9, %c0_10] : memref<8x1xf32, #tpu.memory_space<vmem>>, vector<8x1xf32>
    tpu.vector_store %arg3[%c0_9, %c0_10], %38 {strides = array<i32>} : memref<8x1xf32, #tpu.memory_space<vmem>>, vector<8x1xf32>,
    return
  }
  func.func @transform_0(%arg0: i32) -> (i32, i32) {
    %c0_i32 = arith.constant 0 : i32
    %c0_i32_0 = arith.constant 0 : i32
    return %arg0, %c0_i32 : i32, i32
  }
  func.func @transform_1(%arg0: i32) -> (i32, i32) {
    %c0_i32 = arith.constant 0 : i32
    %c0_i32_0 = arith.constant 0 : i32
    return %arg0, %c0_i32 : i32, i32
  }
  func.func @transform_2(%arg0: i32) -> (i32, i32) {
    %c0_i32 = arith.constant 0 : i32
    %c0_i32_0 = arith.constant 0 : i32
    return %arg0, %c0_i32 : i32, i32
  }
}

</mosaic_0001>

<llo_original>
// kernel: tpu_custom_call.1
$region0: #{tpu_custom_call.1}
  #allocation0 [shape = 'u32[]', space=smem, size = 0x4, offset = 0x4, fixed_abs, tag = 'smem constant byte address 0x4 - core index']
  #allocation1 [shape = 'u32[144,128]{1,0:T(1,128)}', space=vmem, size = 0x12000, scoped, tag = 'internal scratch']
  %s0 = inlined_call_operand.hbm [shape: f32[8,128], index: 0, kind: input, shape index: {}]
  %s1 = inlined_call_operand.hbm [shape: f32[8,128], index: 1, kind: input, shape index: {}]
  %s2 = inlined_call_operand.hbm [shape: f32[8,1], index: 2, kind: output, shape index: {}]
  %s3 = sld [smem:[#allocation0]]
  $region26: #{tpu_custom_call.1} parent=0
    _
  %s5 = ssub.s32 1, %s3
  %s6 = scalar_select 0, %s5, %s3
  $region1: #{tpu_custom_call.1} parent=0
    #allocation2 [shape = 'u8[4096]{0}', space=vmem, size = 0x1000, scoped, tag = 'input window, operand 0, single buffered']
    #allocation3 [shape = 's32[1]{0}', space=sflag, size = 0x4, scoped, tag = 'scoped memory for tpu_custom_call.1']
    #allocation4 [shape = 's32[1]{0}', space=sflag, size = 0x4, scoped, tag = 'scoped memory for tpu_custom_call.1']
    #allocation5 [shape = 'u8[4096]{0}', space=vmem, size = 0x1000, scoped, tag = 'input window, operand 1, single buffered']
    #allocation6 [shape = 's32[1]{0}', space=sflag, size = 0x4, scoped, tag = 'scoped memory for tpu_custom_call.1']
    #allocation7 [shape = 'u8[4096]{0}', space=vmem, size = 0x1000, scoped, tag = 'output window, operand 0, single buffered']
    %7 = vsyncpa [#allocation3], 0
    %8 = vsyncpa [#allocation6], 0
    %9 = vsyncpa [#allocation4], 0
    // Predicated region
    $region2: #{tpu_custom_call.1} parent=1 // pred_check
      _
    $region3: #{tpu_custom_call.1} parent=1 // pred_check_branch
      %11 = sbr.rel (0) target = $region5
    $region4: #{tpu_custom_call.1} parent=1 // pred_region
      %s13 = ssub.s32 128, 128
      %14 = vsyncadd [#allocation3], %s13
      %s16 = sshll.u32 [#allocation2], 4
      %s17 = int_to_ptr.vmem [resolvable:$true] %s16
      %19 = dma.hbm_to_vmem [thread:$0]  %s0, 128, %s17, [#allocation3]
    $region5: #{tpu_custom_call.1} parent=1 // pred_fallthru
      _
    // Predicated region
    $region6: #{tpu_custom_call.1} parent=1 // pred_check
      _
    $region7: #{tpu_custom_call.1} parent=1 // pred_check_branch
      %21 = sbr.rel (0) target = $region9
    $region8: #{tpu_custom_call.1} parent=1 // pred_region
      %s23 = ssub.s32 128, 128
      %24 = vsyncadd [#allocation6], %s23
      %s26 = sshll.u32 [#allocation5], 4
      %s27 = int_to_ptr.vmem [resolvable:$true] %s26
      %29 = dma.hbm_to_vmem [thread:$0]  %s1, 128, %s27, [#allocation6]
    $region9: #{tpu_custom_call.1} parent=1 // pred_fallthru
      _
    // Predicated region
    $region10: #{tpu_custom_call.1} parent=1 // pred_check
      _
    $region11: #{tpu_custom_call.1} parent=1 // pred_check_branch
      %31 = sbr.rel (0) target = $region13
    $region12: #{tpu_custom_call.1} parent=1 // pred_region
      %32 = dma.done [#allocation3], 128
    $region13: #{tpu_custom_call.1} parent=1 // pred_fallthru
      _
    // Predicated region
    $region14: #{tpu_custom_call.1} parent=1 // pred_check
      _
    $region15: #{tpu_custom_call.1} parent=1 // pred_check_branch
      %34 = sbr.rel (0) target = $region17
    $region16: #{tpu_custom_call.1} parent=1 // pred_region
      %35 = dma.done [#allocation6], 128
    $region17: #{tpu_custom_call.1} parent=1 // pred_fallthru
      _
    %v36 = vld [vmem:[#allocation2] sm:$0xff]
    %v37 = vld [vmem:[#allocation5] sm:$0xff]
    %38 = vmax.xlane.f32.xlu0 %v36
    %v39 = vpop.xlane.xlu0 %38
    %v40 = vsub.f32 %v36, %v39
    %v41 = vmul.f32 %v40, 1.442695
    %v42 = vpow.pop %v41
    %43 = vadd.xlane.f32.xlu0 %v42
    %v44 = vpop.xlane.xlu0 %43
    %v45 = vrcp.pop %v44
    %v46 = vmul.f32 %v42, %v45
    %47 = vmax.xlane.f32.xlu0 %v37
    %v48 = vpop.xlane.xlu0 %47
    %v49 = vsub.f32 %v37, %v48
    %v50 = vmul.f32 %v49, 1.442695
    %v51 = vpow.pop %v50
    %52 = vadd.xlane.f32.xlu0 %v51
    %v53 = vpop.xlane.xlu0 %52
    %v54 = vrcp.pop %v53
    %v55 = vmul.f32 %v51, %v54
    %v56 = vadd.f32 %v46, %v55
    %v57 = vmul.f32 %v56, 0.5
    %v58 = vlog2.pop %v57
    %v59 = vmul.f32 %v58, 0.6931472
    %v60 = vmul.f32 %v46, %v40
    %v61 = vmul.f32 %v55, %v49
    %v62 = vadd.f32 %v60, %v61
    %v63 = vmul.f32 %v56, %v59
    %v64 = vsub.f32 %v62, %v63
    %65 = vadd.xlane.f32.xlu0 %v64
    %v66 = vpop.xlane.xlu0 %65
    %v67 = vlog2.pop %v44
    %v68 = vmul.f32 %v67, 0.6931472
    %v69 = vsub.f32 %v66, %v68
    %v70 = vlog2.pop %v53
    %v71 = vmul.f32 %v70, 0.6931472
    %v72 = vsub.f32 %v69, %v71
    %v73 = vmul.f32 %v72, 0.7213475
    %vm74 = vcmask 7168
    %75 = vst.msk [vmem:[#allocation7] sm:$0xff] %vm74, %v73
    // Predicated region
    $region18: #{tpu_custom_call.1} parent=1 // pred_check
      _
    $region19: #{tpu_custom_call.1} parent=1 // pred_check_branch
      %77 = sbr.rel (0) target = $region21
    $region20: #{tpu_custom_call.1} parent=1 // pred_region
      %s79 = ssub.s32 128, 128
      %80 = vsyncadd [#allocation4], %s79
      %s82 = sshll.u32 [#allocation7], 4
      %s83 = int_to_ptr.vmem [resolvable:$true] %s82
      %85 = dma.vmem_to_hbm [thread:$0]  %s83, 128, %s2, [#allocation4]
    $region21: #{tpu_custom_call.1} parent=1 // pred_fallthru
      _
    // Predicated region
    $region22: #{tpu_custom_call.1} parent=1 // pred_check
      _
    $region23: #{tpu_custom_call.1} parent=1 // pred_check_branch
      %87 = sbr.rel (0) target = $region25
    $region24: #{tpu_custom_call.1} parent=1 // pred_region
      %88 = dma.done [#allocation4], 128
    $region25: #{tpu_custom_call.1} parent=1 // pred_fallthru
      _
    %89 = vsyncpa [#allocation3], 1
    %90 = vsyncpa [#allocation6], 1
    %91 = vsyncpa [#allocation4], 1

</llo_original>
